<compile_context>
chip_gen: v7x
topology: tpu7x:2x2x1
jax: 0.10.0
libtpu: 0.0.40
codegen_flags: <defaults>
</compile_context>

<pallas_src>
import jax
import jax.numpy as jnp
from jax import lax
from jax.experimental import pallas as pl
from jax.experimental.pallas import tpu as pltpu


def _round_up(x, m):
    return (x + m - 1) // m * m


def _vmem_capacity_bytes():
    """Physical VMEM per TensorCore (64 MiB on v7x, 128 MiB on v5e/v6e)."""
    try:
        cap = getattr(pltpu.get_tpu_info(), "vmem_capacity_bytes", None)
        if cap:
            return int(cap)
    except Exception:
        pass
    return 64 * 1024 * 1024  # conservative fallback (v7x-sized)


def ensemble_kernel(x1_ref, x2_ref, wa_ref, ba_ref, wb_ref, bb_ref,
                    w1a_ref, w1b_ref, b1_ref, w2_ref, b2_ref, out_ref):
    """One batch tile, features-major compute (batch on the 128-lane axis).

    x1_ref, x2_ref : (TB, 16) raw batch-major inputs    (compute dtype)
    wa_ref, wb_ref : (4, 16)  sub-model weights         (compute dtype)
    ba_ref, bb_ref : (4, 1)   sub-model biases          (f32)
    w1a_ref,w1b_ref: (4, 4)   classifier weight halves  (compute dtype)
    b1_ref         : (4, 1)   classifier bias           (f32)
    w2_ref         : (4, 4)   classifier2 weight        (compute dtype)
    b2_ref         : (4, 1)   classifier2 bias          (f32)
    out_ref        : (4, TB)  f32, features-major (lane-dense store)
    """
    cdt = w1a_ref.dtype
    # Contract the feature (lane) axis of both operands: (4,F) x (TB,F) -> (4,TB).
    # Same MXU pattern as q @ k.T in flash attention; no explicit transpose or
    # host-side relayout of the big operand is required.
    dn = (((1,), (1,)), ((), ()))

    f1 = lax.dot_general(wa_ref[...], x1_ref[...], dn,
                         preferred_element_type=jnp.float32) + ba_ref[...]
    f2 = lax.dot_general(wb_ref[...], x2_ref[...], dn,
                         preferred_element_type=jnp.float32) + bb_ref[...]

    # classifier(relu(cat(f1, f2))) == w1[:, :4]@relu(f1) + w1[:, 4:]@relu(f2) + b1
    r1 = jnp.maximum(f1, 0.0).astype(cdt)
    r2 = jnp.maximum(f2, 0.0).astype(cdt)
    h = (jnp.dot(w1a_ref[...], r1, preferred_element_type=jnp.float32)
         + jnp.dot(w1b_ref[...], r2, preferred_element_type=jnp.float32)
         + b1_ref[...])

    # classifier2(relu(h))
    h = jnp.maximum(h, 0.0).astype(cdt)
    out_ref[...] = (jnp.dot(w2_ref[...], h, preferred_element_type=jnp.float32)
                    + b2_ref[...]).astype(out_ref.dtype)


def _plan_tile(n, tb, itemsize):
    """Pick a lane-aligned batch tile + a scoped-VMEM budget for it.

    Worst-case VMEM per batch row of the tile:
      * 2 inputs x 2 pipeline buffers x (16-wide row lane-padded to 128)
      * f32 (4, TB) output x 2 buffers (4 sublanes padded to 8)
    """
    per_row = 2 * 2 * 128 * itemsize + 2 * 8 * 4
    budget = min(max(_vmem_capacity_bytes() - 24 * 2**20, 8 * 2**20), 96 * 2**20)
    tb_cap = max(128, budget // per_row // 128 * 128)        # gen-aware cap
    tb_r = max(128, min(int(tb) // 128 * 128, tb_cap))       # 128-aligned tile

    if n <= tb_r:
        # One tile covers everything.  Once it is big enough, split it in two
        # so the "parallel" axis actually feeds both TensorCores on v7x.
        tb_eff = _round_up((n + 1) // 2, 128) if n >= 4096 else n
    else:
        tb_eff = tb_r

    steps = pl.cdiv(n, tb_eff)                # ragged last tile handled by Pallas
    rows = _round_up(tb_eff, 8)
    vmem_limit = int(max(32 * 2**20, rows * per_row + 8 * 2**20))
    return tb_eff, int(steps), vmem_limit


def my_ensemble_forward(x1, x2, params, *, tb=65536, features_major_output=False):
    """Fused MyEnsemble forward pass.

    x1, x2 : (n, 16) arrays (f32, or bf16 if that is the at-rest format).
    Returns (n, 4) f32 by default, or the kernel-native (4, n) f32 when
    features_major_output=True (skips the trailing XLA transpose pass).
    """
    (wa, ba, wb, bb, w1, b1, w2, b2) = params
    n, din = x1.shape
    assert x2.shape == (n, din)
    assert wa.shape == (4, din) and wb.shape == (4, din)

    cdt = x1.dtype
    if x2.dtype != cdt:
        x2 = x2.astype(cdt)

    # ---- tiny host-side weight prep (a few KiB; constant-folded under jit) ----
    wa_c = wa.astype(cdt)
    wb_c = wb.astype(cdt)
    w1a_c = w1[:, :4].astype(cdt)            # classifier weight acting on f1
    w1b_c = w1[:, 4:].astype(cdt)            # classifier weight acting on f2
    w2_c = w2.astype(cdt)
    ba_c = ba.reshape(4, 1).astype(jnp.float32)
    bb_c = bb.reshape(4, 1).astype(jnp.float32)
    b1_c = b1.reshape(4, 1).astype(jnp.float32)
    b2_c = b2.reshape(4, 1).astype(jnp.float32)

    tb_eff, steps, vmem_limit = _plan_tile(n, tb, jnp.dtype(cdt).itemsize)

    def const_spec(shape):
        # full-array block, VMEM-resident across all grid steps
        return pl.BlockSpec(shape, lambda i: (0, 0))

    out_t = pl.pallas_call(
        ensemble_kernel,
        out_shape=jax.ShapeDtypeStruct((4, n), jnp.float32),
        grid=(steps,),
        in_specs=[
            pl.BlockSpec((tb_eff, din), lambda i: (i, 0)),   # x1, batch-tiled
            pl.BlockSpec((tb_eff, din), lambda i: (i, 0)),   # x2, batch-tiled
            const_spec((4, din)),   # wa
            const_spec((4, 1)),     # ba
            const_spec((4, din)),   # wb
            const_spec((4, 1)),     # bb
            const_spec((4, 4)),     # w1a
            const_spec((4, 4)),     # w1b
            const_spec((4, 1)),     # b1
            const_spec((4, 4)),     # w2
            const_spec((4, 1)),     # b2
        ],
        out_specs=pl.BlockSpec((4, tb_eff), lambda i: (0, i)),
        compiler_params=pltpu.CompilerParams(
            dimension_semantics=("parallel",),    # batch tiles are independent
            vmem_limit_bytes=vmem_limit),
    )(x1, x2, wa_c, ba_c, wb_c, bb_c, w1a_c, w1b_c, b1_c, w2_c, b2_c)

    if features_major_output:
        return out_t                    # (4, n): no extra HBM pass
    return out_t.T                      # (n, 4): matches the PyTorch module


def make_params(key):
    ks = jax.random.split(key, 8)
    scale = 0.1
    # PyTorch Linear weights are (out_features, in_features).
    wa = scale * jax.random.normal(ks[0], (4, 16), jnp.float32)   # modelA
    ba = scale * jax.random.normal(ks[1], (4,), jnp.float32)
    wb = scale * jax.random.normal(ks[2], (4, 16), jnp.float32)   # modelB
    bb = scale * jax.random.normal(ks[3], (4,), jnp.float32)
    w1 = scale * jax.random.normal(ks[4], (4, 8), jnp.float32)    # classifier
    b1 = scale * jax.random.normal(ks[5], (4,), jnp.float32)
    w2 = scale * jax.random.normal(ks[6], (4, 4), jnp.float32)    # classifier2
    b2 = scale * jax.random.normal(ks[7], (4,), jnp.float32)
    return (wa, ba, wb, bb, w1, b1, w2, b2)


def reference_forward(x1, x2, params):
    (wa, ba, wb, bb, w1, b1, w2, b2) = params
    f1 = x1 @ wa.T + ba
    f2 = x2 @ wb.T + bb
    x = jnp.concatenate([f1, f2], axis=1)
    x = jnp.maximum(x, 0.0) @ w1.T + b1
    x = jnp.maximum(x, 0.0) @ w2.T + b2
    return x


if __name__ == "__main__":
    key = jax.random.PRNGKey(0)
    k1, k2, k3, k4, kp = jax.random.split(key, 5)
    params = make_params(kp)
    din = 16

    # --- tiny batch: single full-extent block ---
    x1 = jax.random.normal(k1, (8, din), jnp.float32)
    x2 = jax.random.normal(k2, (8, din), jnp.float32)
    out = jax.block_until_ready(my_ensemble_forward(x1, x2, params))
    ref = reference_forward(x1, x2, params)
    assert out.shape == (8, 4)
    assert jnp.allclose(out, ref, atol=1e-5, rtol=1e-5)

    # features-major output path (skips the trailing transpose)
    out_fm = jax.block_until_ready(
        my_ensemble_forward(x1, x2, params, features_major_output=True))
    assert out_fm.shape == (4, 8)
    assert jnp.allclose(out_fm.T, ref, atol=1e-5, rtol=1e-5)

    # --- multi-step grid with a ragged final tile (n=300, TB=128 -> 3 steps) ---
    y1 = jax.random.normal(k3, (300, din), jnp.float32)
    y2 = jax.random.normal(k4, (300, din), jnp.float32)
    out2 = jax.block_until_ready(my_ensemble_forward(y1, y2, params, tb=128))
    ref2 = reference_forward(y1, y2, params)
    assert out2.shape == (300, 4)
    assert jnp.allclose(out2, ref2, atol=1e-5, rtol=1e-5)

    # --- larger batch: single tile auto-split in two (megacore path) ---
    z1 = jax.random.normal(k1, (4096, din), jnp.float32)
    z2 = jax.random.normal(k2, (4096, din), jnp.float32)
    out3 = jax.block_until_ready(my_ensemble_forward(z1, z2, params))
    ref3 = reference_forward(z1, z2, params)
    assert out3.shape == (4096, 4)
    assert jnp.allclose(out3, ref3, atol=1e-4, rtol=1e-4)

    # --- bf16 at-rest inputs (weights follow the input dtype), f32 accumulation ---
    out4 = jax.block_until_ready(
        my_ensemble_forward(y1.astype(jnp.bfloat16), y2.astype(jnp.bfloat16), params))
    assert out4.shape == (300, 4)
    assert jnp.allclose(out4, ref2, atol=3e-2, rtol=3e-2)

    print("KERNEL_OK")
</pallas_src>

<mosaic_0001>
module attributes {stable_mosaic.version = 11 : i64} {
  func.func @ensemble_kernel(%arg0: i32, %arg1: memref<8x16xf32, #tpu.memory_space<vmem>>, %arg2: memref<8x16xf32, #tpu.memory_space<vmem>>, %arg3: memref<4x16xf32, #tpu.memory_space<vmem>>, %arg4: memref<4x1xf32, #tpu.memory_space<vmem>>, %arg5: memref<4x16xf32, #tpu.memory_space<vmem>>, %arg6: memref<4x1xf32, #tpu.memory_space<vmem>>, %arg7: memref<4x4xf32, #tpu.memory_space<vmem>>, %arg8: memref<4x4xf32, #tpu.memory_space<vmem>>, %arg9: memref<4x1xf32, #tpu.memory_space<vmem>>, %arg10: memref<4x4xf32, #tpu.memory_space<vmem>>, %arg11: memref<4x1xf32, #tpu.memory_space<vmem>>, %arg12: memref<4x8xf32, #tpu.memory_space<vmem>>) attributes {dimension_semantics = [#tpu.dimension_semantics<parallel>], iteration_bounds = array<i64: 1>, scalar_prefetch = 0 : i64, scratch_operands = 0 : i64, tpu.core_type = #tpu.core_type<tc>, window_params = [{transform_indices = @transform_0, window_bounds = array<i64: 8, 16>}, {transform_indices = @transform_1, window_bounds = array<i64: 8, 16>}, {pipeline_mode = #tpu.pipeline_mode<synchronous>, transform_indices = @transform_2, window_bounds = array<i64: 4, 16>}, {pipeline_mode = #tpu.pipeline_mode<synchronous>, transform_indices = @transform_3, window_bounds = array<i64: 4, 1>}, {pipeline_mode = #tpu.pipeline_mode<synchronous>, transform_indices = @transform_4, window_bounds = array<i64: 4, 16>}, {pipeline_mode = #tpu.pipeline_mode<synchronous>, transform_indices = @transform_5, window_bounds = array<i64: 4, 1>}, {pipeline_mode = #tpu.pipeline_mode<synchronous>, transform_indices = @transform_6, window_bounds = array<i64: 4, 4>}, {pipeline_mode = #tpu.pipeline_mode<synchronous>, transform_indices = @transform_7, window_bounds = array<i64: 4, 4>}, {pipeline_mode = #tpu.pipeline_mode<synchronous>, transform_indices = @transform_8, window_bounds = array<i64: 4, 1>}, {pipeline_mode = #tpu.pipeline_mode<synchronous>, transform_indices = @transform_9, window_bounds = array<i64: 4, 4>}, {pipeline_mode = #tpu.pipeline_mode<synchronous>, transform_indices = @transform_10, window_bounds = array<i64: 4, 1>}, {transform_indices = @transform_11, window_bounds = array<i64: 4, 8>}]} {
    %c0 = arith.constant 0 : index
    %c0_0 = arith.constant 0 : index
    %0 = vector.load %arg3[%c0, %c0_0] : memref<4x16xf32, #tpu.memory_space<vmem>>, vector<4x16xf32>
    %c0_1 = arith.constant 0 : index
    %c0_2 = arith.constant 0 : index
    %1 = vector.load %arg1[%c0_1, %c0_2] : memref<8x16xf32, #tpu.memory_space<vmem>>, vector<8x16xf32>
    %cst = arith.constant dense<0.000000e+00> : vector<4x8xf32>
    %2 = tpu.matmul %0, %1, %cst {dimension_numbers = #tpu.dot_dimension_numbers<[1], [1], [0], [0], [0, 0, 1, 0], [], []>} : vector<4x16xf32>, vector<8x16xf32>, vector<4x8xf32> -> vector<4x8xf32>
    %c0_3 = arith.constant 0 : index
    %c0_4 = arith.constant 0 : index
    %3 = vector.load %arg4[%c0_3, %c0_4] : memref<4x1xf32, #tpu.memory_space<vmem>>, vector<4x1xf32>
    %4 = vector.broadcast %3 : vector<4x1xf32> to vector<4x8xf32>
    %5 = arith.addf %2, %4 : vector<4x8xf32>
    %c0_5 = arith.constant 0 : index
    %c0_6 = arith.constant 0 : index
    %6 = vector.load %arg5[%c0_5, %c0_6] : memref<4x16xf32, #tpu.memory_space<vmem>>, vector<4x16xf32>
    %c0_7 = arith.constant 0 : index
    %c0_8 = arith.constant 0 : index
    %7 = vector.load %arg2[%c0_7, %c0_8] : memref<8x16xf32, #tpu.memory_space<vmem>>, vector<8x16xf32>
    %cst_9 = arith.constant dense<0.000000e+00> : vector<4x8xf32>
    %8 = tpu.matmul %6, %7, %cst_9 {dimension_numbers = #tpu.dot_dimension_numbers<[1], [1], [0], [0], [0, 0, 1, 0], [], []>} : vector<4x16xf32>, vector<8x16xf32>, vector<4x8xf32> -> vector<4x8xf32>
    %c0_10 = arith.constant 0 : index
    %c0_11 = arith.constant 0 : index
    %9 = vector.load %arg6[%c0_10, %c0_11] : memref<4x1xf32, #tpu.memory_space<vmem>>, vector<4x1xf32>
    %10 = vector.broadcast %9 : vector<4x1xf32> to vector<4x8xf32>
    %11 = arith.addf %8, %10 : vector<4x8xf32>
    %cst_12 = arith.constant 0.000000e+00 : f32
    %12 = vector.broadcast %cst_12 : f32 to vector<4x8xf32>
    %13 = arith.maximumf %5, %12 : vector<4x8xf32>
    %cst_13 = arith.constant 0.000000e+00 : f32
    %14 = vector.broadcast %cst_13 : f32 to vector<4x8xf32>
    %15 = arith.maximumf %11, %14 : vector<4x8xf32>
    %c0_14 = arith.constant 0 : index
    %c0_15 = arith.constant 0 : index
    %16 = vector.load %arg7[%c0_14, %c0_15] : memref<4x4xf32, #tpu.memory_space<vmem>>, vector<4x4xf32>
    %cst_16 = arith.constant dense<0.000000e+00> : vector<4x8xf32>
    %17 = tpu.matmul %16, %13, %cst_16 {dimension_numbers = #tpu.dot_dimension_numbers<[1], [0], [0], [1], [0, 0, 1, 1], [], []>} : vector<4x4xf32>, vector<4x8xf32>, vector<4x8xf32> -> vector<4x8xf32>
    %c0_17 = arith.constant 0 : index
    %c0_18 = arith.constant 0 : index
    %18 = vector.load %arg8[%c0_17, %c0_18] : memref<4x4xf32, #tpu.memory_space<vmem>>, vector<4x4xf32>
    %cst_19 = arith.constant dense<0.000000e+00> : vector<4x8xf32>
    %19 = tpu.matmul %18, %15, %cst_19 {dimension_numbers = #tpu.dot_dimension_numbers<[1], [0], [0], [1], [0, 0, 1, 1], [], []>} : vector<4x4xf32>, vector<4x8xf32>, vector<4x8xf32> -> vector<4x8xf32>
    %20 = arith.addf %17, %19 : vector<4x8xf32>
    %c0_20 = arith.constant 0 : index
    %c0_21 = arith.constant 0 : index
    %21 = vector.load %arg9[%c0_20, %c0_21] : memref<4x1xf32, #tpu.memory_space<vmem>>, vector<4x1xf32>
    %22 = vector.broadcast %21 : vector<4x1xf32> to vector<4x8xf32>
    %23 = arith.addf %20, %22 : vector<4x8xf32>
    %cst_22 = arith.constant 0.000000e+00 : f32
    %24 = vector.broadcast %cst_22 : f32 to vector<4x8xf32>
    %25 = arith.maximumf %23, %24 : vector<4x8xf32>
    %c0_23 = arith.constant 0 : index
    %c0_24 = arith.constant 0 : index
    %26 = vector.load %arg10[%c0_23, %c0_24] : memref<4x4xf32, #tpu.memory_space<vmem>>, vector<4x4xf32>
    %cst_25 = arith.constant dense<0.000000e+00> : vector<4x8xf32>
    %27 = tpu.matmul %26, %25, %cst_25 {dimension_numbers = #tpu.dot_dimension_numbers<[1], [0], [0], [1], [0, 0, 1, 1], [], []>} : vector<4x4xf32>, vector<4x8xf32>, vector<4x8xf32> -> vector<4x8xf32>
    %c0_26 = arith.constant 0 : index
    %c0_27 = arith.constant 0 : index
    %28 = vector.load %arg11[%c0_26, %c0_27] : memref<4x1xf32, #tpu.memory_space<vmem>>, vector<4x1xf32>
    %29 = vector.broadcast %28 : vector<4x1xf32> to vector<4x8xf32>
    %30 = arith.addf %27, %29 : vector<4x8xf32>
    %c0_28 = arith.constant 0 : index
    %c0_29 = arith.constant 0 : index
    %31 = vector.load %arg12[%c0_28, %c0_29] : memref<4x8xf32, #tpu.memory_space<vmem>>, vector<4x8xf32>
    tpu.vector_store %arg12[%c0_28, %c0_29], %30 {strides = array<i32>} : memref<4x8xf32, #tpu.memory_space<vmem>>, vector<4x8xf32>,
    return
  }
  func.func @transform_0(%arg0: i32) -> (i32, i32) {
    %c0_i32 = arith.constant 0 : i32
    %c0_i32_0 = arith.constant 0 : i32
    return %arg0, %c0_i32 : i32, i32
  }
  func.func @transform_1(%arg0: i32) -> (i32, i32) {
    %c0_i32 = arith.constant 0 : i32
    %c0_i32_0 = arith.constant 0 : i32
    return %arg0, %c0_i32 : i32, i32
  }
  func.func @transform_2(%arg0: i32) -> (i32, i32) {
    %c0_i32 = arith.constant 0 : i32
    %c0_i32_0 = arith.constant 0 : i32
    %c0_i32_1 = arith.constant 0 : i32
    return %c0_i32, %c0_i32_0 : i32, i32
  }
  func.func @transform_3(%arg0: i32) -> (i32, i32) {
    %c0_i32 = arith.constant 0 : i32
    %c0_i32_0 = arith.constant 0 : i32
    %c0_i32_1 = arith.constant 0 : i32
    return %c0_i32, %c0_i32_0 : i32, i32
  }
  func.func @transform_4(%arg0: i32) -> (i32, i32) {
    %c0_i32 = arith.constant 0 : i32
    %c0_i32_0 = arith.constant 0 : i32
    %c0_i32_1 = arith.constant 0 : i32
    return %c0_i32, %c0_i32_0 : i32, i32
  }
  func.func @transform_5(%arg0: i32) -> (i32, i32) {
    %c0_i32 = arith.constant 0 : i32
    %c0_i32_0 = arith.constant 0 : i32
    %c0_i32_1 = arith.constant 0 : i32
    return %c0_i32, %c0_i32_0 : i32, i32
  }
  func.func @transform_6(%arg0: i32) -> (i32, i32) {
    %c0_i32 = arith.constant 0 : i32
    %c0_i32_0 = arith.constant 0 : i32
    %c0_i32_1 = arith.constant 0 : i32
    return %c0_i32, %c0_i32_0 : i32, i32
  }
  func.func @transform_7(%arg0: i32) -> (i32, i32) {
    %c0_i32 = arith.constant 0 : i32
    %c0_i32_0 = arith.constant 0 : i32
    %c0_i32_1 = arith.constant 0 : i32
    return %c0_i32, %c0_i32_0 : i32, i32
  }
  func.func @transform_8(%arg0: i32) -> (i32, i32) {
    %c0_i32 = arith.constant 0 : i32
    %c0_i32_0 = arith.constant 0 : i32
    %c0_i32_1 = arith.constant 0 : i32
    return %c0_i32, %c0_i32_0 : i32, i32
  }
  func.func @transform_9(%arg0: i32) -> (i32, i32) {
    %c0_i32 = arith.constant 0 : i32
    %c0_i32_0 = arith.constant 0 : i32
    %c0_i32_1 = arith.constant 0 : i32
    return %c0_i32, %c0_i32_0 : i32, i32
  }
  func.func @transform_10(%arg0: i32) -> (i32, i32) {
    %c0_i32 = arith.constant 0 : i32
    %c0_i32_0 = arith.constant 0 : i32
    %c0_i32_1 = arith.constant 0 : i32
    return %c0_i32, %c0_i32_0 : i32, i32
  }
  func.func @transform_11(%arg0: i32) -> (i32, i32) {
    %c0_i32 = arith.constant 0 : i32
    %c0_i32_0 = arith.constant 0 : i32
    return %c0_i32, %arg0 : i32, i32
  }
}

</mosaic_0001>

<llo_original>
// kernel: tpu_custom_call.1
$region0: #{tpu_custom_call.1}
  #allocation0 [shape = 'u32[]', space=smem, size = 0x4, offset = 0x4, fixed_abs, tag = 'smem constant byte address 0x4 - core index']
  #allocation1 [shape = 'u32[144,128]{1,0:T(1,128)}', space=vmem, size = 0x12000, scoped, tag = 'internal scratch']
  %s0 = inlined_call_operand.vmem [shape: f32[8,16], index: 0, kind: input, shape index: {}]
  %s1 = inlined_call_operand.vmem [shape: f32[8,16], index: 1, kind: input, shape index: {}]
  %s2 = inlined_call_operand.vmem [shape: f32[4,16], index: 2, kind: input, shape index: {}]
  %s3 = inlined_call_operand.vmem [shape: f32[4,1], index: 3, kind: input, shape index: {}]
  %s4 = inlined_call_operand.vmem [shape: f32[4,16], index: 4, kind: input, shape index: {}]
  %s5 = inlined_call_operand.vmem [shape: f32[4,1], index: 5, kind: input, shape index: {}]
  %s6 = inlined_call_operand.vmem [shape: f32[4,4], index: 6, kind: input, shape index: {}]
  %s7 = inlined_call_operand.vmem [shape: f32[4,4], index: 7, kind: input, shape index: {}]
  %s8 = inlined_call_operand.vmem [shape: f32[4,1], index: 8, kind: input, shape index: {}]
  %s9 = inlined_call_operand.vmem [shape: f32[4,4], index: 9, kind: input, shape index: {}]
  %s10 = inlined_call_operand.vmem [shape: f32[4,1], index: 10, kind: input, shape index: {}]
  %s11 = inlined_call_operand.hbm [shape: f32[4,8], index: 11, kind: output, shape index: {}]
  %s12 = sld [smem:[#allocation0]]
  $region54: #{tpu_custom_call.1} parent=0
    _
  %s14 = ssub.s32 1, %s12
  %s15 = scalar_select 0, %s14, %s12
  $region1: #{tpu_custom_call.1} parent=0
    #allocation2 [shape = 'u8[2048]{0}', space=vmem, size = 0x800, scoped, tag = 'output window, operand 0, single buffered']
    #allocation3 [shape = 's32[1]{0}', space=sflag, size = 0x4, scoped, tag = 'scoped memory for tpu_custom_call.1']
    %16 = vsyncpa [#allocation3], 0
    // Predicated region
    $region2: #{tpu_custom_call.1} parent=1 // pred_check
      _
    $region3: #{tpu_custom_call.1} parent=1 // pred_check_branch
      %18 = sbr.rel (0) target = $region5
    $region4: #{tpu_custom_call.1} parent=1 // pred_region
      _
    $region5: #{tpu_custom_call.1} parent=1 // pred_fallthru
      _
    // Predicated region
    $region6: #{tpu_custom_call.1} parent=1 // pred_check
      _
    $region7: #{tpu_custom_call.1} parent=1 // pred_check_branch
      %20 = sbr.rel (0) target = $region9
    $region8: #{tpu_custom_call.1} parent=1 // pred_region
      _
    $region9: #{tpu_custom_call.1} parent=1 // pred_fallthru
      _
    // Predicated region
    $region10: #{tpu_custom_call.1} parent=1 // pred_check
      _
    $region11: #{tpu_custom_call.1} parent=1 // pred_check_branch
      %22 = sbr.rel (0) target = $region13
    $region12: #{tpu_custom_call.1} parent=1 // pred_region
      _
    $region13: #{tpu_custom_call.1} parent=1 // pred_fallthru
      _
    // Predicated region
    $region14: #{tpu_custom_call.1} parent=1 // pred_check
      _
    $region15: #{tpu_custom_call.1} parent=1 // pred_check_branch
      %24 = sbr.rel (0) target = $region17
    $region16: #{tpu_custom_call.1} parent=1 // pred_region
      _
    $region17: #{tpu_custom_call.1} parent=1 // pred_fallthru
      _
    // Predicated region
    $region18: #{tpu_custom_call.1} parent=1 // pred_check
      _
    $region19: #{tpu_custom_call.1} parent=1 // pred_check_branch
      %26 = sbr.rel (0) target = $region21
    $region20: #{tpu_custom_call.1} parent=1 // pred_region
      _
    $region21: #{tpu_custom_call.1} parent=1 // pred_fallthru
      _
    // Predicated region
    $region22: #{tpu_custom_call.1} parent=1 // pred_check
      _
    $region23: #{tpu_custom_call.1} parent=1 // pred_check_branch
      %28 = sbr.rel (0) target = $region25
    $region24: #{tpu_custom_call.1} parent=1 // pred_region
      _
    $region25: #{tpu_custom_call.1} parent=1 // pred_fallthru
      _
    // Predicated region
    $region26: #{tpu_custom_call.1} parent=1 // pred_check
      _
    $region27: #{tpu_custom_call.1} parent=1 // pred_check_branch
      %30 = sbr.rel (0) target = $region29
    $region28: #{tpu_custom_call.1} parent=1 // pred_region
      _
    $region29: #{tpu_custom_call.1} parent=1 // pred_fallthru
      _
    // Predicated region
    $region30: #{tpu_custom_call.1} parent=1 // pred_check
      _
    $region31: #{tpu_custom_call.1} parent=1 // pred_check_branch
      %32 = sbr.rel (0) target = $region33
    $region32: #{tpu_custom_call.1} parent=1 // pred_region
      _
    $region33: #{tpu_custom_call.1} parent=1 // pred_fallthru
      _
    // Predicated region
    $region34: #{tpu_custom_call.1} parent=1 // pred_check
      _
    $region35: #{tpu_custom_call.1} parent=1 // pred_check_branch
      %34 = sbr.rel (0) target = $region37
    $region36: #{tpu_custom_call.1} parent=1 // pred_region
      _
    $region37: #{tpu_custom_call.1} parent=1 // pred_fallthru
      _
    // Predicated region
    $region38: #{tpu_custom_call.1} parent=1 // pred_check
      _
    $region39: #{tpu_custom_call.1} parent=1 // pred_check_branch
      %36 = sbr.rel (0) target = $region41
    $region40: #{tpu_custom_call.1} parent=1 // pred_region
      _
    $region41: #{tpu_custom_call.1} parent=1 // pred_fallthru
      _
    // Predicated region
    $region42: #{tpu_custom_call.1} parent=1 // pred_check
      _
    $region43: #{tpu_custom_call.1} parent=1 // pred_check_branch
      %38 = sbr.rel (0) target = $region45
    $region44: #{tpu_custom_call.1} parent=1 // pred_region
      _
    $region45: #{tpu_custom_call.1} parent=1 // pred_fallthru
      _
    %v39 = vld [vmem:[%s2] sm:$0xf]
    %v40 = vld [vmem:[%s0] sm:$0xff]
    %v41 = vld [vmem:[%s3] sm:$0xf]
    %43 = vset.pattern.permute.xlu0 0
    %44 = vperm.xlu0 %43, %v41
    %v45 = vpop.permute.xlu0 %44
    %vm47 = vcmask 130048
    %v49 = vsel %vm47, %v39, 0
    %v52 = vsel %vm47, %v40, 0
    %54 = vmatprep.subr.mxu0 0.0
    %55 = vmatpush1.xpose.msra.mxu0 %v52
    %56 = vmatprep.subr.mxu0 0.0
    %57 = vmatpush1.xpose.msra.mxu0 0.0
    %58 = vmatprep.subr.mxu0 0.0
    %59 = vmatpush1.xpose.msra.mxu0 0.0
    %60 = vmatprep.subr.mxu0 0.0
    %61 = vmatpush1.xpose.msra.mxu0 0.0
    %62 = vmatprep.subr.mxu0 0.0
    %63 = vmatpush1.xpose.msra.mxu0 0.0
    %64 = vmatprep.subr.mxu0 0.0
    %65 = vmatpush1.xpose.msra.mxu0 0.0
    %66 = vmatprep.subr.mxu0 0.0
    %67 = vmatpush1.xpose.msra.mxu0 0.0
    %68 = vmatprep.subr.mxu0 0.0
    %69 = vmatpush1.xpose.msra.mxu0 0.0
    %70 = vmatprep.subr.mxu0 0.0
    %71 = vmatpush1.xpose.msra.mxu0 0.0
    %72 = vmatprep.subr.mxu0 0.0
    %73 = vmatpush1.xpose.msra.mxu0 0.0
    %74 = vmatprep.subr.mxu0 0.0
    %75 = vmatpush1.xpose.msra.mxu0 0.0
    %76 = vmatprep.subr.mxu0 0.0
    %77 = vmatpush1.xpose.msra.mxu0 0.0
    %78 = vmatprep.subr.mxu0 0.0
    %79 = vmatpush1.xpose.msra.mxu0 0.0
    %80 = vmatprep.subr.mxu0 0.0
    %81 = vmatpush1.xpose.msra.mxu0 0.0
    %82 = vmatprep.subr.mxu0 0.0
    %83 = vmatpush1.xpose.msra.mxu0 0.0
    %84 = vmatprep.subr.mxu0 0.0
    %85 = vmatpush1.xpose.msra.mxu0 0.0
    %86 = vmatprep.subr.mxu0 0.0
    %87 = vmatpush1.xpose.msra.mxu0 0.0
    %88 = vmatprep.subr.mxu0 0.0
    %89 = vmatpush1.xpose.msra.mxu0 0.0
    %90 = vmatprep.subr.mxu0 0.0
    %91 = vmatpush1.xpose.msra.mxu0 0.0
    %92 = vmatprep.subr.mxu0 0.0
    %93 = vmatpush1.xpose.msra.mxu0 0.0
    %94 = vmatprep.subr.mxu0 0.0
    %95 = vmatpush1.xpose.msra.mxu0 0.0
    %96 = vmatprep.subr.mxu0 0.0
    %97 = vmatpush1.xpose.msra.mxu0 0.0
    %98 = vmatprep.subr.mxu0 0.0
    %99 = vmatpush1.xpose.msra.mxu0 0.0
    %100 = vmatprep.subr.mxu0 0.0
    %101 = vmatpush1.xpose.msra.mxu0 0.0
    %102 = vmatprep.subr.mxu0 0.0
    %103 = vmatpush1.xpose.msra.mxu0 0.0
    %104 = vmatprep.subr.mxu0 0.0
    %105 = vmatpush1.xpose.msra.mxu0 0.0
    %106 = vmatprep.subr.mxu0 0.0
    %107 = vmatpush1.xpose.msra.mxu0 0.0
    %108 = vmatprep.subr.mxu0 0.0
    %109 = vmatpush1.xpose.msra.mxu0 0.0
    %110 = vmatprep.subr.mxu0 0.0
    %111 = vmatpush1.xpose.msra.mxu0 0.0
    %112 = vmatprep.subr.mxu0 0.0
    %113 = vmatpush1.xpose.msra.mxu0 0.0
    %114 = vmatprep.subr.mxu0 0.0
    %115 = vmatpush1.xpose.msra.mxu0 0.0
    %116 = vmatprep.subr.mxu0 0.0
    %117 = vmatpush1.xpose.msra.mxu0 0.0
    %118 = vmatprep.mubr.f32.mxu0 0.0
    %119 = vmatmul.mubr.f32.gmra.mrb[0].mxu0 %v49
    %v120 = vpop.f32.mrb[0].mxu0
    %v121 = vadd.f32 %v45, %v120
    %v122 = vpop.f32.mrb[0].mxu0
    %123 = vdwg.mxu0
    %v124 = vld [vmem:[%s4] sm:$0xf]
    %v125 = vld [vmem:[%s1] sm:$0xff]
    %v126 = vld [vmem:[%s5] sm:$0xf]
    %128 = vset.pattern.permute.xlu0 0
    %129 = vperm.xlu0 %128, %v126
    %v130 = vpop.permute.xlu0 %129
    %v133 = vsel %vm47, %v124, 0
    %v136 = vsel %vm47, %v125, 0
    %138 = vmatprep.subr.mxu0 0.0
    %139 = vmatpush1.xpose.msra.mxu0 %v136
    %140 = vmatprep.subr.mxu0 0.0
    %141 = vmatpush1.xpose.msra.mxu0 0.0
    %142 = vmatprep.subr.mxu0 0.0
    %143 = vmatpush1.xpose.msra.mxu0 0.0
    %144 = vmatprep.subr.mxu0 0.0
    %145 = vmatpush1.xpose.msra.mxu0 0.0
    %146 = vmatprep.subr.mxu0 0.0
    %147 = vmatpush1.xpose.msra.mxu0 0.0
    %148 = vmatprep.subr.mxu0 0.0
    %149 = vmatpush1.xpose.msra.mxu0 0.0
    %150 = vmatprep.subr.mxu0 0.0
    %151 = vmatpush1.xpose.msra.mxu0 0.0
    %152 = vmatprep.subr.mxu0 0.0
    %153 = vmatpush1.xpose.msra.mxu0 0.0
    %154 = vmatprep.subr.mxu0 0.0
    %155 = vmatpush1.xpose.msra.mxu0 0.0
    %156 = vmatprep.subr.mxu0 0.0
    %157 = vmatpush1.xpose.msra.mxu0 0.0
    %158 = vmatprep.subr.mxu0 0.0
    %159 = vmatpush1.xpose.msra.mxu0 0.0
    %160 = vmatprep.subr.mxu0 0.0
    %161 = vmatpush1.xpose.msra.mxu0 0.0
    %162 = vmatprep.subr.mxu0 0.0
    %163 = vmatpush1.xpose.msra.mxu0 0.0
    %164 = vmatprep.subr.mxu0 0.0
    %165 = vmatpush1.xpose.msra.mxu0 0.0
    %166 = vmatprep.subr.mxu0 0.0
    %167 = vmatpush1.xpose.msra.mxu0 0.0
    %168 = vmatprep.subr.mxu0 0.0
    %169 = vmatpush1.xpose.msra.mxu0 0.0
    %170 = vmatprep.subr.mxu0 0.0
    %171 = vmatpush1.xpose.msra.mxu0 0.0
    %172 = vmatprep.subr.mxu0 0.0
    %173 = vmatpush1.xpose.msra.mxu0 0.0
    %174 = vmatprep.subr.mxu0 0.0
    %175 = vmatpush1.xpose.msra.mxu0 0.0
    %176 = vmatprep.subr.mxu0 0.0
    %177 = vmatpush1.xpose.msra.mxu0 0.0
    %178 = vmatprep.subr.mxu0 0.0
    %179 = vmatpush1.xpose.msra.mxu0 0.0
    %180 = vmatprep.subr.mxu0 0.0
    %181 = vmatpush1.xpose.msra.mxu0 0.0
    %182 = vmatprep.subr.mxu0 0.0
    %183 = vmatpush1.xpose.msra.mxu0 0.0
    %184 = vmatprep.subr.mxu0 0.0
    %185 = vmatpush1.xpose.msra.mxu0 0.0
    %186 = vmatprep.subr.mxu0 0.0
    %187 = vmatpush1.xpose.msra.mxu0 0.0
    %188 = vmatprep.subr.mxu0 0.0
    %189 = vmatpush1.xpose.msra.mxu0 0.0
    %190 = vmatprep.subr.mxu0 0.0
    %191 = vmatpush1.xpose.msra.mxu0 0.0
    %192 = vmatprep.subr.mxu0 0.0
    %193 = vmatpush1.xpose.msra.mxu0 0.0
    %194 = vmatprep.subr.mxu0 0.0
    %195 = vmatpush1.xpose.msra.mxu0 0.0
    %196 = vmatprep.subr.mxu0 0.0
    %197 = vmatpush1.xpose.msra.mxu0 0.0
    %198 = vmatprep.subr.mxu0 0.0
    %199 = vmatpush1.xpose.msra.mxu0 0.0
    %200 = vmatprep.subr.mxu0 0.0
    %201 = vmatpush1.xpose.msra.mxu0 0.0
    %202 = vmatprep.mubr.f32.mxu0 0.0
    %203 = vmatmul.mubr.f32.gmra.mrb[0].mxu0 %v133
    %v204 = vpop.f32.mrb[0].mxu0
    %v205 = vadd.f32 %v130, %v204
    %v206 = vpop.f32.mrb[0].mxu0
    %207 = vdwg.mxu0
    %v208 = vmax.f32 %v121, 0.0
    %v209 = vmax.f32 %v205, 0.0
    %v210 = vld [vmem:[%s6] sm:$0xf]
    %v211 = vld [vmem:[%s7] sm:$0xf]
    %vm212 = vcmask 31744
    %v214 = vsel %vm212, %v211, 0
    %vm216 = vcmask 1043456
    %v218 = vsel %vm216, %v209, 0
    %220 = vmatprep.subr.mxu0 0.0
    %221 = vmatpush1.msra.mxu0 %v218
    %222 = vmatprep.subr.mxu0 0.0
    %223 = vmatpush1.msra.mxu0 0.0
    %224 = vmatprep.subr.mxu0 0.0
    %225 = vmatpush1.msra.mxu0 0.0
    %226 = vmatprep.subr.mxu0 0.0
    %227 = vmatpush1.msra.mxu0 0.0
    %228 = vmatprep.subr.mxu0 0.0
    %229 = vmatpush1.msra.mxu0 0.0
    %230 = vmatprep.subr.mxu0 0.0
    %231 = vmatpush1.msra.mxu0 0.0
    %232 = vmatprep.subr.mxu0 0.0
    %233 = vmatpush1.msra.mxu0 0.0
    %234 = vmatprep.subr.mxu0 0.0
    %235 = vmatpush1.msra.mxu0 0.0
    %236 = vmatprep.subr.mxu0 0.0
    %237 = vmatpush1.msra.mxu0 0.0
    %238 = vmatprep.subr.mxu0 0.0
    %239 = vmatpush1.msra.mxu0 0.0
    %240 = vmatprep.subr.mxu0 0.0
    %241 = vmatpush1.msra.mxu0 0.0
    %242 = vmatprep.subr.mxu0 0.0
    %243 = vmatpush1.msra.mxu0 0.0
    %244 = vmatprep.subr.mxu0 0.0
    %245 = vmatpush1.msra.mxu0 0.0
    %246 = vmatprep.subr.mxu0 0.0
    %247 = vmatpush1.msra.mxu0 0.0
    %248 = vmatprep.subr.mxu0 0.0
    %249 = vmatpush1.msra.mxu0 0.0
    %250 = vmatprep.subr.mxu0 0.0
    %251 = vmatpush1.msra.mxu0 0.0
    %252 = vmatprep.subr.mxu0 0.0
    %253 = vmatpush1.msra.mxu0 0.0
    %254 = vmatprep.subr.mxu0 0.0
    %255 = vmatpush1.msra.mxu0 0.0
    %256 = vmatprep.subr.mxu0 0.0
    %257 = vmatpush1.msra.mxu0 0.0
    %258 = vmatprep.subr.mxu0 0.0
    %259 = vmatpush1.msra.mxu0 0.0
    %260 = vmatprep.subr.mxu0 0.0
    %261 = vmatpush1.msra.mxu0 0.0
    %262 = vmatprep.subr.mxu0 0.0
    %263 = vmatpush1.msra.mxu0 0.0
    %264 = vmatprep.subr.mxu0 0.0
    %265 = vmatpush1.msra.mxu0 0.0
    %266 = vmatprep.subr.mxu0 0.0
    %267 = vmatpush1.msra.mxu0 0.0
    %268 = vmatprep.subr.mxu0 0.0
    %269 = vmatpush1.msra.mxu0 0.0
    %270 = vmatprep.subr.mxu0 0.0
    %271 = vmatpush1.msra.mxu0 0.0
    %272 = vmatprep.subr.mxu0 0.0
    %273 = vmatpush1.msra.mxu0 0.0
    %274 = vmatprep.subr.mxu0 0.0
    %275 = vmatpush1.msra.mxu0 0.0
    %276 = vmatprep.subr.mxu0 0.0
    %277 = vmatpush1.msra.mxu0 0.0
    %278 = vmatprep.subr.mxu0 0.0
    %279 = vmatpush1.msra.mxu0 0.0
    %280 = vmatprep.subr.mxu0 0.0
    %281 = vmatpush1.msra.mxu0 0.0
    %282 = vmatprep.subr.mxu0 0.0
    %283 = vmatpush1.msra.mxu0 0.0
    %284 = vmatprep.mubr.f32.mxu0 0.0
    %285 = vmatmul.mubr.f32.gmra.mrb[0].mxu0 %v214
    %v286 = vpop.f32.mrb[0].mxu0
    %v287 = vadd.f32 0.0, %v286
    %v288 = vpop.f32.mrb[0].mxu0
    %289 = vdwg.mxu0
    %v291 = vsel %vm212, %v210, 0
    %v294 = vsel %vm216, %v208, 0
    %296 = vmatprep.subr.mxu0 0.0
    %297 = vmatpush1.msra.mxu0 %v294
    %298 = vmatprep.subr.mxu0 0.0
    %299 = vmatpush1.msra.mxu0 0.0
    %300 = vmatprep.subr.mxu0 0.0
    %301 = vmatpush1.msra.mxu0 0.0
    %302 = vmatprep.subr.mxu0 0.0
    %303 = vmatpush1.msra.mxu0 0.0
    %304 = vmatprep.subr.mxu0 0.0
    %305 = vmatpush1.msra.mxu0 0.0
    %306 = vmatprep.subr.mxu0 0.0
    %307 = vmatpush1.msra.mxu0 0.0
    %308 = vmatprep.subr.mxu0 0.0
    %309 = vmatpush1.msra.mxu0 0.0
    %310 = vmatprep.subr.mxu0 0.0
    %311 = vmatpush1.msra.mxu0 0.0
    %312 = vmatprep.subr.mxu0 0.0
    %313 = vmatpush1.msra.mxu0 0.0
    %314 = vmatprep.subr.mxu0 0.0
    %315 = vmatpush1.msra.mxu0 0.0
    %316 = vmatprep.subr.mxu0 0.0
    %317 = vmatpush1.msra.mxu0 0.0
    %318 = vmatprep.subr.mxu0 0.0
    %319 = vmatpush1.msra.mxu0 0.0
    %320 = vmatprep.subr.mxu0 0.0
    %321 = vmatpush1.msra.mxu0 0.0
    %322 = vmatprep.subr.mxu0 0.0
    %323 = vmatpush1.msra.mxu0 0.0
    %324 = vmatprep.subr.mxu0 0.0
    %325 = vmatpush1.msra.mxu0 0.0
    %326 = vmatprep.subr.mxu0 0.0
    %327 = vmatpush1.msra.mxu0 0.0
    %328 = vmatprep.subr.mxu0 0.0
    %329 = vmatpush1.msra.mxu0 0.0
    %330 = vmatprep.subr.mxu0 0.0
    %331 = vmatpush1.msra.mxu0 0.0
    %332 = vmatprep.subr.mxu0 0.0
    %333 = vmatpush1.msra.mxu0 0.0
    %334 = vmatprep.subr.mxu0 0.0
    %335 = vmatpush1.msra.mxu0 0.0
    %336 = vmatprep.subr.mxu0 0.0
    %337 = vmatpush1.msra.mxu0 0.0
    %338 = vmatprep.subr.mxu0 0.0
    %339 = vmatpush1.msra.mxu0 0.0
    %340 = vmatprep.subr.mxu0 0.0
    %341 = vmatpush1.msra.mxu0 0.0
    %342 = vmatprep.subr.mxu0 0.0
    %343 = vmatpush1.msra.mxu0 0.0
    %344 = vmatprep.subr.mxu0 0.0
    %345 = vmatpush1.msra.mxu0 0.0
    %346 = vmatprep.subr.mxu0 0.0
    %347 = vmatpush1.msra.mxu0 0.0
    %348 = vmatprep.subr.mxu0 0.0
    %349 = vmatpush1.msra.mxu0 0.0
    %350 = vmatprep.subr.mxu0 0.0
    %351 = vmatpush1.msra.mxu0 0.0
    %352 = vmatprep.subr.mxu0 0.0
    %353 = vmatpush1.msra.mxu0 0.0
    %354 = vmatprep.subr.mxu0 0.0
    %355 = vmatpush1.msra.mxu0 0.0
    %356 = vmatprep.subr.mxu0 0.0
    %357 = vmatpush1.msra.mxu0 0.0
    %358 = vmatprep.subr.mxu0 0.0
    %359 = vmatpush1.msra.mxu0 0.0
    %360 = vmatprep.mubr.f32.mxu0 0.0
    %361 = vmatmul.mubr.f32.gmra.mrb[0].mxu0 %v291
    %v362 = vpop.f32.mrb[0].mxu0
    %v363 = vadd.f32 %v287, %v362
    %v364 = vpop.f32.mrb[0].mxu0
    %365 = vdwg.mxu0
    %v366 = vld [vmem:[%s8] sm:$0xf]
    %368 = vset.pattern.permute.xlu0 0
    %369 = vperm.xlu0 %368, %v366
    %v370 = vpop.permute.xlu0 %369
    %v372 = vadd.f32 %v363, %v370
    %v373 = vmax.f32 %v372, 0.0
    %v374 = vld [vmem:[%s9] sm:$0xf]
    %v375 = vld [vmem:[%s10] sm:$0xf]
    %377 = vset.pattern.permute.xlu0 0
    %378 = vperm.xlu0 %377, %v375
    %v379 = vpop.permute.xlu0 %378
    %v382 = vsel %vm212, %v374, 0
    %v385 = vsel %vm216, %v373, 0
    %387 = vmatprep.subr.mxu0 0.0
    %388 = vmatpush1.msra.mxu0 %v385
    %389 = vmatprep.subr.mxu0 0.0
    %390 = vmatpush1.msra.mxu0 0.0
    %391 = vmatprep.subr.mxu0 0.0
    %392 = vmatpush1.msra.mxu0 0.0
    %393 = vmatprep.subr.mxu0 0.0
    %394 = vmatpush1.msra.mxu0 0.0
    %395 = vmatprep.subr.mxu0 0.0
    %396 = vmatpush1.msra.mxu0 0.0
    %397 = vmatprep.subr.mxu0 0.0
    %398 = vmatpush1.msra.mxu0 0.0
    %399 = vmatprep.subr.mxu0 0.0
    %400 = vmatpush1.msra.mxu0 0.0
    %401 = vmatprep.subr.mxu0 0.0
    %402 = vmatpush1.msra.mxu0 0.0
    %403 = vmatprep.subr.mxu0 0.0
    %404 = vmatpush1.msra.mxu0 0.0
    %405 = vmatprep.subr.mxu0 0.0
    %406 = vmatpush1.msra.mxu0 0.0
    %407 = vmatprep.subr.mxu0 0.0
    %408 = vmatpush1.msra.mxu0 0.0
    %409 = vmatprep.subr.mxu0 0.0
    %410 = vmatpush1.msra.mxu0 0.0
    %411 = vmatprep.subr.mxu0 0.0
    %412 = vmatpush1.msra.mxu0 0.0
    %413 = vmatprep.subr.mxu0 0.0
    %414 = vmatpush1.msra.mxu0 0.0
    %415 = vmatprep.subr.mxu0 0.0
    %416 = vmatpush1.msra.mxu0 0.0
    %417 = vmatprep.subr.mxu0 0.0
    %418 = vmatpush1.msra.mxu0 0.0
    %419 = vmatprep.subr.mxu0 0.0
    %420 = vmatpush1.msra.mxu0 0.0
    %421 = vmatprep.subr.mxu0 0.0
    %422 = vmatpush1.msra.mxu0 0.0
    %423 = vmatprep.subr.mxu0 0.0
    %424 = vmatpush1.msra.mxu0 0.0
    %425 = vmatprep.subr.mxu0 0.0
    %426 = vmatpush1.msra.mxu0 0.0
    %427 = vmatprep.subr.mxu0 0.0
    %428 = vmatpush1.msra.mxu0 0.0
    %429 = vmatprep.subr.mxu0 0.0
    %430 = vmatpush1.msra.mxu0 0.0
    %431 = vmatprep.subr.mxu0 0.0
    %432 = vmatpush1.msra.mxu0 0.0
    %433 = vmatprep.subr.mxu0 0.0
    %434 = vmatpush1.msra.mxu0 0.0
    %435 = vmatprep.subr.mxu0 0.0
    %436 = vmatpush1.msra.mxu0 0.0
    %437 = vmatprep.subr.mxu0 0.0
    %438 = vmatpush1.msra.mxu0 0.0
    %439 = vmatprep.subr.mxu0 0.0
    %440 = vmatpush1.msra.mxu0 0.0
    %441 = vmatprep.subr.mxu0 0.0
    %442 = vmatpush1.msra.mxu0 0.0
    %443 = vmatprep.subr.mxu0 0.0
    %444 = vmatpush1.msra.mxu0 0.0
    %445 = vmatprep.subr.mxu0 0.0
    %446 = vmatpush1.msra.mxu0 0.0
    %447 = vmatprep.subr.mxu0 0.0
    %448 = vmatpush1.msra.mxu0 0.0
    %449 = vmatprep.subr.mxu0 0.0
    %450 = vmatpush1.msra.mxu0 0.0
    %451 = vmatprep.mubr.f32.mxu0 0.0
    %452 = vmatmul.mubr.f32.gmra.mrb[0].mxu0 %v382
    %v453 = vpop.f32.mrb[0].mxu0
    %v454 = vadd.f32 %v379, %v453
    %v455 = vpop.f32.mrb[0].mxu0
    %456 = vdwg.mxu0
    %vm457 = vcmask 60416
    %458 = vst.msk [vmem:[#allocation2] sm:$0xf] %vm457, %v454
    // Predicated region
    $region46: #{tpu_custom_call.1} parent=1 // pred_check
      _
    $region47: #{tpu_custom_call.1} parent=1 // pred_check_branch
      %460 = sbr.rel (0) target = $region49
    $region48: #{tpu_custom_call.1} parent=1 // pred_region
      %s462 = ssub.s32 64, 64
      %463 = vsyncadd [#allocation3], %s462
      %s465 = sshll.u32 [#allocation2], 4
      %s466 = int_to_ptr.vmem [resolvable:$true] %s465
      %468 = dma.vmem_to_hbm [thread:$0]  %s466, 64, %s11, [#allocation3]
    $region49: #{tpu_custom_call.1} parent=1 // pred_fallthru
      _
    // Predicated region
    $region50: #{tpu_custom_call.1} parent=1 // pred_check
      _
    $region51: #{tpu_custom_call.1} parent=1 // pred_check_branch
      %470 = sbr.rel (0) target = $region53
    $region52: #{tpu_custom_call.1} parent=1 // pred_region
      %471 = dma.done [#allocation3], 64
    $region53: #{tpu_custom_call.1} parent=1 // pred_fallthru
      _
    %472 = vsyncpa [#allocation3], 1

</llo_original>
